<compile_context>
chip_gen: v7x
topology: tpu7x:2x2x1
jax: 0.10.0
libtpu: 0.0.40
codegen_flags: <defaults>
</compile_context>

<pallas_src>
import functools

import jax
import jax.numpy as jnp
from jax import lax
from jax.experimental import pallas as pl
from jax.experimental.pallas import tpu as pltpu


def _round_up(x, m):
    return (x + m - 1) // m * m


def _biaffine_kernel(x1_ref, x2_ref, w1_ref, b1_ref, w2_ref, b2_ref, wp_ref,
                     out_ref, g1_buf, g2_buf):
    """One (batch, S1-tile, class) grid step.

    x1_ref: (1, tS1, D1)   x2_ref: (1, S2, D2)
    w1_ref: (D1, Hp)  b1_ref: (1, Hp)  w2_ref: (D2, Hp)  b2_ref: (1, Hp)
    wp_ref: (1, Hp, Hp)  this class's biaffine weight block (zero padded)
    out_ref: (1, 1, tS1, S2)
    g1_buf : (tS1, Hp) persistent VMEM scratch (augmented ffn1, per S1 tile)
    g2_buf : (S2, Hp)  persistent VMEM scratch (augmented ffn2, per batch)
    """
    cdt = w1_ref.dtype                       # MXU compute dtype (bf16 default)
    s = pl.program_id(1)
    o = pl.program_id(2)

    # ffn2 + augmentation: computed once per batch, reused by all tiles/classes.
    @pl.when(jnp.logical_and(s == 0, o == 0))
    def _():
        h2 = jnp.dot(x2_ref[0], w2_ref[...],
                     preferred_element_type=jnp.float32) + b2_ref[...]
        g2_buf[...] = jnp.maximum(h2, 0.0).astype(cdt)        # (S2, Hp)

    # ffn1 + augmentation: computed once per S1 tile, reused across classes.
    # g1 = [relu(x1 W1^T + b1), 1, 0..0]
    @pl.when(o == 0)
    def _():
        h1 = jnp.dot(x1_ref[0], w1_ref[...],
                     preferred_element_type=jnp.float32) + b1_ref[...]
        g1_buf[...] = jnp.maximum(h1, 0.0).astype(cdt)        # (tS1, Hp)

    # Per-class biaffine:  (g1 @ W_o) @ g2^T — both matmuls lane-aligned,
    # f32 accumulation on the MXU.
    a = jnp.dot(g1_buf[...], wp_ref[0],
                preferred_element_type=jnp.float32)            # (tS1, Hp)
    out_ref[0, 0] = lax.dot_general(
        a.astype(cdt), g2_buf[...],
        (((1,), (1,)), ((), ())),
        preferred_element_type=jnp.float32)                    # (tS1, S2)


def prepare_params(params, in_dim1, in_dim2, hidden_dim, output_dim,
                   compute_dtype=jnp.bfloat16):
    """One-time parameter layout prep (hoisted out of the per-call path).

    NOTE on semantics: the torch module's mm/view chain reinterprets the
    flattened pairwise_weight column index (written as (r, o)) as (o, r) blocks
    of width H+1.  wp3 below reproduces exactly that reinterpretation; keep it
    in sync with torch_reference or results silently change.
    """
    H, O = hidden_dim, output_dim
    Hp = _round_up(H + 1, 128)

    def ffn(w, b, d_in):
        w_aug = jnp.zeros((d_in, Hp), jnp.float32).at[:, :H].set(
            jnp.asarray(w, jnp.float32).T)
        b_aug = jnp.zeros((1, Hp), jnp.float32).at[0, :H].set(
            jnp.asarray(b, jnp.float32))
        b_aug = b_aug.at[0, H].set(1.0)              # the "cat ones" column
        return w_aug.astype(compute_dtype), b_aug    # bias stays f32 (epilogue)

    w1a, b1a = ffn(params["ffn1_w"], params["ffn1_b"], in_dim1)
    w2a, b2a = ffn(params["ffn2_w"], params["ffn2_b"], in_dim2)

    pw = jnp.asarray(params["pairwise_weight"], jnp.float32)   # (H+1, H+1, O)
    w_flat = pw.reshape(H + 1, (H + 1) * O)     # columns written as (r, o)
    wp3 = w_flat.reshape(H + 1, O, H + 1)       # ... re-read as (o, r) (torch view)
    wp3 = jnp.transpose(wp3, (1, 0, 2))         # (O, H+1, H+1) per-class blocks
    wp = jnp.zeros((O, Hp, Hp), jnp.float32).at[:, :H + 1, :H + 1].set(wp3)
    return w1a, b1a, w2a, b2a, wp.astype(compute_dtype)        # zero pad = no-op


@functools.partial(jax.jit,
                   static_argnames=("output_dim", "block_s1", "transpose_output"))
def fixed_class_deep_biaffine(x1, x2, w1a, b1a, w2a, b2a, wp, *,
                              output_dim, block_s1=256, transpose_output=True):
    B, S1, D1 = x1.shape
    _, S2, D2 = x2.shape
    O = output_dim
    Hp = w1a.shape[1]
    cdt = w1a.dtype

    block_s1 = max(8, (block_s1 // 8) * 8)           # keep (8,128) tiling legal
    tS1 = S1 if S1 <= block_s1 else block_s1
    nS1 = pl.cdiv(S1, tS1)

    x1c = x1.astype(cdt)                             # halves activation DMA (bf16)
    x2c = x2.astype(cdt)

    out = pl.pallas_call(
        _biaffine_kernel,
        out_shape=jax.ShapeDtypeStruct((B, O, S1, S2), jnp.float32),
        grid_spec=pltpu.PrefetchScalarGridSpec(
            num_scalar_prefetch=0,
            grid=(B, nS1, O),                        # batch / S1 tiles / classes
            in_specs=[
                pl.BlockSpec((1, tS1, D1), lambda b, s, o: (b, s, 0)),
                pl.BlockSpec((1, S2, D2), lambda b, s, o: (b, 0, 0)),
                pl.BlockSpec((D1, Hp), lambda b, s, o: (0, 0)),
                pl.BlockSpec((1, Hp), lambda b, s, o: (0, 0)),
                pl.BlockSpec((D2, Hp), lambda b, s, o: (0, 0)),
                pl.BlockSpec((1, Hp), lambda b, s, o: (0, 0)),
                pl.BlockSpec((1, Hp, Hp), lambda b, s, o: (o, 0, 0)),  # streamed
            ],
            out_specs=pl.BlockSpec((1, 1, tS1, S2), lambda b, s, o: (b, o, s, 0)),
            scratch_shapes=[pltpu.VMEM((tS1, Hp), cdt),   # g1 cache (per tile)
                            pltpu.VMEM((S2, Hp), cdt)],   # g2 cache (per batch)
        ),
        compiler_params=pltpu.CompilerParams(
            dimension_semantics=("parallel", "arbitrary", "arbitrary"),
            vmem_limit_bytes=64 * 1024 * 1024),
    )(x1c, x2c, w1a, b1a, w2a, b2a, wp)

    if not transpose_output:
        return out                                   # (B, O, S1, S2): no HBM transpose
    return jnp.transpose(out, (0, 2, 3, 1))          # torch layout (B, S1, S2, O)


def torch_reference(x1, x2, params, hidden_dim, output_dim):
    """Pure-JAX transliteration of the PyTorch forward (eval mode), f32/highest."""
    H, O = hidden_dim, output_dim
    P = jax.lax.Precision.HIGHEST
    h1 = jax.nn.relu(jnp.matmul(x1, params["ffn1_w"].T, precision=P) + params["ffn1_b"])
    h2 = jax.nn.relu(jnp.matmul(x2, params["ffn2_w"].T, precision=P) + params["ffn2_b"])
    g1 = jnp.concatenate([h1, jnp.ones(h1.shape[:-1] + (1,), h1.dtype)], axis=-1)
    g2 = jnp.concatenate([h2, jnp.ones(h2.shape[:-1] + (1,), h2.dtype)], axis=-1)
    B, S1, _ = g1.shape
    _, S2, _ = g2.shape
    g1_w = jnp.matmul(g1.reshape(-1, H + 1),
                      params["pairwise_weight"].reshape(-1, (H + 1) * O), precision=P)
    g1_w_g2 = jnp.matmul(g1_w.reshape(B, S1 * O, H + 1),
                         jnp.swapaxes(g2, 1, 2), precision=P)
    return jnp.swapaxes(g1_w_g2.reshape(B, S1, O, S2), 2, 3)


if __name__ == "__main__":
    B, S1, S2 = 2, 8, 8
    in_dim = hidden_dim = 32   # torch forward requires in_dim1 == in_dim2 == hidden
    output_dim = 4

    key = jax.random.PRNGKey(0)
    k = jax.random.split(key, 7)
    x1 = jax.random.normal(k[0], (B, S1, in_dim), jnp.float32)
    x2 = jax.random.normal(k[1], (B, S2, in_dim), jnp.float32)
    params = {
        "ffn1_w": jax.random.normal(k[2], (hidden_dim, in_dim), jnp.float32) * 0.1,
        "ffn1_b": jax.random.normal(k[3], (hidden_dim,), jnp.float32) * 0.1,
        "ffn2_w": jax.random.normal(k[4], (hidden_dim, in_dim), jnp.float32) * 0.1,
        "ffn2_b": jax.random.normal(k[5], (hidden_dim,), jnp.float32) * 0.1,
        # Module zero-inits pairwise_weight; random values exercise the kernel.
        "pairwise_weight": jax.random.normal(
            k[6], (in_dim + 1, in_dim + 1, output_dim), jnp.float32) * 0.1,
    }
    # TODO(synk): train-mode Dropout(0.5) (stochastic masking) not implemented;
    # eval-mode (identity) inference semantics only.

    ref = torch_reference(x1, x2, params, hidden_dim, output_dim)

    # 1) f32 compute path: tight structural check (indexing / wp reinterpretation).
    prep32 = prepare_params(params, in_dim, in_dim, hidden_dim, output_dim,
                            compute_dtype=jnp.float32)
    out32 = jax.block_until_ready(
        fixed_class_deep_biaffine(x1, x2, *prep32, output_dim=output_dim))
    assert out32.shape == (B, S1, S2, output_dim), out32.shape
    assert jnp.allclose(out32, ref, atol=2e-3, rtol=2e-3), \
        float(jnp.max(jnp.abs(out32 - ref)))

    # 2) bf16 compute path (default performance config): loosened tolerance.
    prepbf = prepare_params(params, in_dim, in_dim, hidden_dim, output_dim,
                            compute_dtype=jnp.bfloat16)
    outbf = jax.block_until_ready(
        fixed_class_deep_biaffine(x1, x2, *prepbf, output_dim=output_dim))
    assert outbf.shape == (B, S1, S2, output_dim), outbf.shape
    assert jnp.allclose(outbf, ref, atol=1e-1, rtol=1e-1), \
        float(jnp.max(jnp.abs(outbf - ref)))

    print("KERNEL_OK")
</pallas_src>

<mosaic_0001>
module attributes {stable_mosaic.version = 11 : i64} {
  func.func @_biaffine_kernel(%arg0: i32, %arg1: i32, %arg2: i32, %arg3: memref<1x8x32xf32, #tpu.memory_space<vmem>>, %arg4: memref<1x8x32xf32, #tpu.memory_space<vmem>>, %arg5: memref<32x128xf32, #tpu.memory_space<vmem>>, %arg6: memref<1x128xf32, #tpu.memory_space<vmem>>, %arg7: memref<32x128xf32, #tpu.memory_space<vmem>>, %arg8: memref<1x128xf32, #tpu.memory_space<vmem>>, %arg9: memref<1x128x128xf32, #tpu.memory_space<vmem>>, %arg10: memref<1x1x8x8xf32, #tpu.memory_space<vmem>>, %arg11: memref<8x128xf32, #tpu.memory_space<vmem>>, %arg12: memref<8x128xf32, #tpu.memory_space<vmem>>) attributes {dimension_semantics = [#tpu.dimension_semantics<parallel>, #tpu.dimension_semantics<arbitrary>, #tpu.dimension_semantics<arbitrary>], iteration_bounds = array<i64: 2, 1, 4>, scalar_prefetch = 0 : i64, scratch_operands = 2 : i64, tpu.core_type = #tpu.core_type<tc>, window_params = [{transform_indices = @transform_0, window_bounds = array<i64: 1, 8, 32>}, {transform_indices = @transform_1, window_bounds = array<i64: 1, 8, 32>}, {pipeline_mode = #tpu.pipeline_mode<synchronous>, transform_indices = @transform_2, window_bounds = array<i64: 32, 128>}, {pipeline_mode = #tpu.pipeline_mode<synchronous>, transform_indices = @transform_3, window_bounds = array<i64: 1, 128>}, {pipeline_mode = #tpu.pipeline_mode<synchronous>, transform_indices = @transform_4, window_bounds = array<i64: 32, 128>}, {pipeline_mode = #tpu.pipeline_mode<synchronous>, transform_indices = @transform_5, window_bounds = array<i64: 1, 128>}, {transform_indices = @transform_6, window_bounds = array<i64: 1, 128, 128>}, {transform_indices = @transform_7, window_bounds = array<i64: 1, 1, 8, 8>}]} {
    %c0_i32 = arith.constant 0 : i32
    %0 = arith.cmpi eq, %arg1, %c0_i32 : i32
    %c0_i32_0 = arith.constant 0 : i32
    %1 = arith.cmpi eq, %arg2, %c0_i32_0 : i32
    %2 = arith.andi %0, %1 : i1
    %3 = arith.extui %2 : i1 to i32
    %c0_i32_1 = arith.constant 0 : i32
    %4 = arith.cmpi ne, %3, %c0_i32_1 : i32
    scf.if %4 {
      %c0_15 = arith.constant 0 : index
      %c0_16 = arith.constant 0 : index
      %c0_17 = arith.constant 0 : index
      %17 = vector.load %arg4[%c0_15, %c0_16, %c0_17] : memref<1x8x32xf32, #tpu.memory_space<vmem>>, vector<1x8x32xf32>
      %18 = vector.shape_cast %17 : vector<1x8x32xf32> to vector<8x32xf32>
      %c0_18 = arith.constant 0 : index
      %c0_19 = arith.constant 0 : index
      %19 = vector.load %arg7[%c0_18, %c0_19] : memref<32x128xf32, #tpu.memory_space<vmem>>, vector<32x128xf32>
      %cst_20 = arith.constant dense<0.000000e+00> : vector<8x128xf32>
      %20 = tpu.matmul %18, %19, %cst_20 {dimension_numbers = #tpu.dot_dimension_numbers<[1], [0], [0], [1], [0, 0, 1, 1], [], []>} : vector<8x32xf32>, vector<32x128xf32>, vector<8x128xf32> -> vector<8x128xf32>
      %c0_21 = arith.constant 0 : index
      %c0_22 = arith.constant 0 : index
      %21 = vector.load %arg8[%c0_21, %c0_22] : memref<1x128xf32, #tpu.memory_space<vmem>>, vector<1x128xf32>
      %22 = vector.broadcast %21 : vector<1x128xf32> to vector<8x128xf32>
      %23 = arith.addf %20, %22 : vector<8x128xf32>
      %cst_23 = arith.constant 0.000000e+00 : f32
      %24 = vector.broadcast %cst_23 : f32 to vector<8x128xf32>
      %25 = arith.maximumf %23, %24 : vector<8x128xf32>
      %c0_24 = arith.constant 0 : index
      %c0_25 = arith.constant 0 : index
      %26 = vector.load %arg12[%c0_24, %c0_25] : memref<8x128xf32, #tpu.memory_space<vmem>>, vector<8x128xf32>
      tpu.vector_store %arg12[%c0_24, %c0_25], %25 {strides = array<i32>} : memref<8x128xf32, #tpu.memory_space<vmem>>, vector<8x128xf32>,
    } else {
    }
    %c0_i32_2 = arith.constant 0 : i32
    %5 = arith.cmpi eq, %arg2, %c0_i32_2 : i32
    %6 = arith.extui %5 : i1 to i32
    %c0_i32_3 = arith.constant 0 : i32
    %7 = arith.cmpi ne, %6, %c0_i32_3 : i32
    scf.if %7 {
      %c0_15 = arith.constant 0 : index
      %c0_16 = arith.constant 0 : index
      %c0_17 = arith.constant 0 : index
      %17 = vector.load %arg3[%c0_15, %c0_16, %c0_17] : memref<1x8x32xf32, #tpu.memory_space<vmem>>, vector<1x8x32xf32>
      %18 = vector.shape_cast %17 : vector<1x8x32xf32> to vector<8x32xf32>
      %c0_18 = arith.constant 0 : index
      %c0_19 = arith.constant 0 : index
      %19 = vector.load %arg5[%c0_18, %c0_19] : memref<32x128xf32, #tpu.memory_space<vmem>>, vector<32x128xf32>
      %cst_20 = arith.constant dense<0.000000e+00> : vector<8x128xf32>
      %20 = tpu.matmul %18, %19, %cst_20 {dimension_numbers = #tpu.dot_dimension_numbers<[1], [0], [0], [1], [0, 0, 1, 1], [], []>} : vector<8x32xf32>, vector<32x128xf32>, vector<8x128xf32> -> vector<8x128xf32>
      %c0_21 = arith.constant 0 : index
      %c0_22 = arith.constant 0 : index
      %21 = vector.load %arg6[%c0_21, %c0_22] : memref<1x128xf32, #tpu.memory_space<vmem>>, vector<1x128xf32>
      %22 = vector.broadcast %21 : vector<1x128xf32> to vector<8x128xf32>
      %23 = arith.addf %20, %22 : vector<8x128xf32>
      %cst_23 = arith.constant 0.000000e+00 : f32
      %24 = vector.broadcast %cst_23 : f32 to vector<8x128xf32>
      %25 = arith.maximumf %23, %24 : vector<8x128xf32>
      %c0_24 = arith.constant 0 : index
      %c0_25 = arith.constant 0 : index
      %26 = vector.load %arg11[%c0_24, %c0_25] : memref<8x128xf32, #tpu.memory_space<vmem>>, vector<8x128xf32>
      tpu.vector_store %arg11[%c0_24, %c0_25], %25 {strides = array<i32>} : memref<8x128xf32, #tpu.memory_space<vmem>>, vector<8x128xf32>,
    } else {
    }
    %c0 = arith.constant 0 : index
    %c0_4 = arith.constant 0 : index
    %8 = vector.load %arg11[%c0, %c0_4] : memref<8x128xf32, #tpu.memory_space<vmem>>, vector<8x128xf32>
    %c0_5 = arith.constant 0 : index
    %c0_6 = arith.constant 0 : index
    %c0_7 = arith.constant 0 : index
    %9 = vector.load %arg9[%c0_5, %c0_6, %c0_7] : memref<1x128x128xf32, #tpu.memory_space<vmem>>, vector<1x128x128xf32>
    %10 = vector.shape_cast %9 : vector<1x128x128xf32> to vector<128x128xf32>
    %cst = arith.constant dense<0.000000e+00> : vector<8x128xf32>
    %11 = tpu.matmul %8, %10, %cst {dimension_numbers = #tpu.dot_dimension_numbers<[1], [0], [0], [1], [0, 0, 1, 1], [], []>} : vector<8x128xf32>, vector<128x128xf32>, vector<8x128xf32> -> vector<8x128xf32>
    %c0_8 = arith.constant 0 : index
    %c0_9 = arith.constant 0 : index
    %12 = vector.load %arg12[%c0_8, %c0_9] : memref<8x128xf32, #tpu.memory_space<vmem>>, vector<8x128xf32>
    %cst_10 = arith.constant dense<0.000000e+00> : vector<8x8xf32>
    %13 = tpu.matmul %11, %12, %cst_10 {dimension_numbers = #tpu.dot_dimension_numbers<[1], [1], [0], [0], [0, 0, 1, 0], [], []>} : vector<8x128xf32>, vector<8x128xf32>, vector<8x8xf32> -> vector<8x8xf32>
    %c0_11 = arith.constant 0 : index
    %c0_12 = arith.constant 0 : index
    %c0_13 = arith.constant 0 : index
    %c0_14 = arith.constant 0 : index
    %14 = vector.load %arg10[%c0_11, %c0_12, %c0_13, %c0_14] : memref<1x1x8x8xf32, #tpu.memory_space<vmem>>, vector<1x1x8x8xf32>
    %15 = vector.shape_cast %14 : vector<1x1x8x8xf32> to vector<8x8xf32>
    %16 = vector.shape_cast %13 : vector<8x8xf32> to vector<1x1x8x8xf32>
    tpu.vector_store %arg10[%c0_11, %c0_12, %c0_13, %c0_14], %16 {strides = array<i32>} : memref<1x1x8x8xf32, #tpu.memory_space<vmem>>, vector<1x1x8x8xf32>,
    return
  }
  func.func @transform_0(%arg0: i32, %arg1: i32, %arg2: i32) -> (i32, i32, i32) {
    %c0_i32 = arith.constant 0 : i32
    %c0_i32_0 = arith.constant 0 : i32
    return %arg0, %arg1, %c0_i32 : i32, i32, i32
  }
  func.func @transform_1(%arg0: i32, %arg1: i32, %arg2: i32) -> (i32, i32, i32) {
    %c0_i32 = arith.constant 0 : i32
    %c0_i32_0 = arith.constant 0 : i32
    %c0_i32_1 = arith.constant 0 : i32
    return %arg0, %c0_i32, %c0_i32_0 : i32, i32, i32
  }
  func.func @transform_2(%arg0: i32, %arg1: i32, %arg2: i32) -> (i32, i32) {
    %c0_i32 = arith.constant 0 : i32
    %c0_i32_0 = arith.constant 0 : i32
    %c0_i32_1 = arith.constant 0 : i32
    return %c0_i32, %c0_i32_0 : i32, i32
  }
  func.func @transform_3(%arg0: i32, %arg1: i32, %arg2: i32) -> (i32, i32) {
    %c0_i32 = arith.constant 0 : i32
    %c0_i32_0 = arith.constant 0 : i32
    %c0_i32_1 = arith.constant 0 : i32
    return %c0_i32, %c0_i32_0 : i32, i32
  }
  func.func @transform_4(%arg0: i32, %arg1: i32, %arg2: i32) -> (i32, i32) {
    %c0_i32 = arith.constant 0 : i32
    %c0_i32_0 = arith.constant 0 : i32
    %c0_i32_1 = arith.constant 0 : i32
    return %c0_i32, %c0_i32_0 : i32, i32
  }
  func.func @transform_5(%arg0: i32, %arg1: i32, %arg2: i32) -> (i32, i32) {
    %c0_i32 = arith.constant 0 : i32
    %c0_i32_0 = arith.constant 0 : i32
    %c0_i32_1 = arith.constant 0 : i32
    return %c0_i32, %c0_i32_0 : i32, i32
  }
  func.func @transform_6(%arg0: i32, %arg1: i32, %arg2: i32) -> (i32, i32, i32) {
    %c0_i32 = arith.constant 0 : i32
    %c0_i32_0 = arith.constant 0 : i32
    %c0_i32_1 = arith.constant 0 : i32
    return %arg2, %c0_i32, %c0_i32_0 : i32, i32, i32
  }
  func.func @transform_7(%arg0: i32, %arg1: i32, %arg2: i32) -> (i32, i32, i32, i32) {
    %c0_i32 = arith.constant 0 : i32
    %c0_i32_0 = arith.constant 0 : i32
    return %arg0, %arg2, %arg1, %c0_i32 : i32, i32, i32, i32
  }
}

</mosaic_0001>

<llo_original>
// kernel: fixed_class_deep_biaffine.1
$region0: #{fixed_class_deep_biaffine.1}
  #allocation0 [shape = 'u32[]', space=smem, size = 0x4, offset = 0x4, fixed_abs, tag = 'smem constant byte address 0x4 - core index']
  #allocation1 [shape = 'u32[144,128]{1,0:T(1,128)}', space=vmem, size = 0x12000, scoped, tag = 'internal scratch']
  #allocation2 [shape = 'f32[8,128]{1,0:T(8,128)}', space=vmem, size = 0x1000, scoped, tag = 'scratch operand']
  #allocation3 [shape = 'f32[8,128]{1,0:T(8,128)}', space=vmem, size = 0x1000, scoped, tag = 'scratch operand']
  %s0 = inlined_call_operand.hbm [shape: f32[2,8,32], index: 0, kind: input, shape index: {}]
  %s1 = inlined_call_operand.hbm [shape: f32[2,8,32], index: 1, kind: input, shape index: {}]
  %s2 = inlined_call_operand.hbm [shape: f32[32,128], index: 2, kind: input, shape index: {}]
  %s3 = inlined_call_operand.hbm [shape: f32[1,128], index: 3, kind: input, shape index: {}]
  %s4 = inlined_call_operand.hbm [shape: f32[32,128], index: 4, kind: input, shape index: {}]
  %s5 = inlined_call_operand.hbm [shape: f32[1,128], index: 5, kind: input, shape index: {}]
  %s6 = inlined_call_operand.hbm [shape: f32[4,128,128], index: 6, kind: input, shape index: {}]
  %s7 = inlined_call_operand.hbm [shape: f32[2,4,8,8], index: 7, kind: output, shape index: {}]
  %s8 = sld [smem:[#allocation0]]
  $region97: #{fixed_class_deep_biaffine.1} parent=0
    _
  %s10 = ssub.s32 1, %s8
  %s11 = scalar_select 0, %s10, %s8
  $region1: #{fixed_class_deep_biaffine.1} parent=0
    #allocation4 [shape = 'u8[8192]{0}', space=vmem, size = 0x2000, scoped, tag = 'input window, operand 0']
    #allocation5 [shape = 's32[2]{0}', space=sflag, size = 0x8, scoped, tag = 'scoped memory for fixed_class_deep_biaffine.1']
    #allocation6 [shape = 's32[2]{0}', space=sflag, size = 0x8, scoped, tag = 'scoped memory for fixed_class_deep_biaffine.1']
    #allocation7 [shape = 'u8[8192]{0}', space=vmem, size = 0x2000, scoped, tag = 'input window, operand 1']
    #allocation8 [shape = 's32[2]{0}', space=sflag, size = 0x8, scoped, tag = 'scoped memory for fixed_class_deep_biaffine.1']
    #allocation9 [shape = 'u8[16384]{0}', space=vmem, size = 0x4000, scoped, tag = 'input window, operand 2, single buffered']
    #allocation10 [shape = 'u8[512]{0}', space=vmem, size = 0x400, scoped, tag = 'input window, operand 3, single buffered']
    #allocation11 [shape = 's32[1]{0}', space=sflag, size = 0x4, scoped, tag = 'scoped memory for fixed_class_deep_biaffine.1']
    #allocation12 [shape = 'u8[16384]{0}', space=vmem, size = 0x4000, scoped, tag = 'input window, operand 4, single buffered']
    #allocation13 [shape = 'u8[512]{0}', space=vmem, size = 0x400, scoped, tag = 'input window, operand 5, single buffered']
    #allocation14 [shape = 's32[1]{0}', space=sflag, size = 0x4, scoped, tag = 'scoped memory for fixed_class_deep_biaffine.1']
    #allocation15 [shape = 'u8[131072]{0}', space=vmem, size = 0x20000, scoped, tag = 'input window, operand 6']
    #allocation16 [shape = 'u8[8192]{0}', space=vmem, size = 0x2000, scoped, tag = 'output window, operand 0']
    %12 = vsyncpa [#allocation5], 0
    %s13 = scalar_lea.sflag [#allocation5], 1
    %14 = vsyncpa %s13, 0
    %15 = vsyncpa [#allocation8], 0
    %s16 = scalar_lea.sflag [#allocation8], 1
    %17 = vsyncpa %s16, 0
    %18 = vsyncpa [#allocation11], 0
    %19 = vsyncpa [#allocation14], 0
    %20 = vsyncpa [#allocation6], 0
    %s21 = scalar_lea.sflag [#allocation6], 1
    %22 = vsyncpa %s21, 0
    loop: start=0, step=1, limit=10
    $region2: #{fixed_class_deep_biaffine.1} parent=1 // loop_pre_header
      _
    $region3: #{fixed_class_deep_biaffine.1} parent=1 // loop_header
      %s24 = sphi 0, %s28
      %p25 = scmp.ge.s32.totalorder %s24, 10
      %s31 = sphi 0, %s50
      %s32 = sphi 0, %s46
      %s33 = sphi 0, %s42
      %s34 = sphi 0, %s31
      %s35 = sphi 0, %s32
      %s36 = sphi 0, %s33
      %s37 = sphi 0, %s34
      %s38 = sphi 0, %s35
      %s39 = sphi 0, %s36
      %s55 = sphi 0, %s57
      %s58 = sphi 0, %s55
      %s59 = sphi 0, %s58
      %s75 = sphi 0, %s59
      %s81 = sphi 0, %s83
      %s84 = sphi 0, %s81
      %s85 = sphi 0, %s84
      %s101 = sphi 0, %s85
      %s105 = sphi 0, %s105
      %s107 = sphi 0, %s105
      %s108 = sphi 0, %s107
      %s122 = sphi 0, %s108
      %s126 = sphi 0, %s126
      %s128 = sphi 0, %s126
      %s129 = sphi 0, %s128
      %s143 = sphi 0, %s129
      %s147 = sphi 0, %s147
      %s149 = sphi 0, %s147
      %s150 = sphi 0, %s149
      %s164 = sphi 0, %s150
      %s168 = sphi 0, %s168
      %s170 = sphi 0, %s168
      %s171 = sphi 0, %s170
      %s185 = sphi 0, %s171
      %s191 = sphi 0, %s193
      %s194 = sphi 0, %s191
      %s195 = sphi 0, %s194
      %s211 = sphi 0, %s195
      %s221 = sphi 0, %s223
      %s224 = sphi 0, %s221
      %s225 = sphi 0, %s224
      %s241 = sphi 0, %s225
    $region4: #{fixed_class_deep_biaffine.1} parent=1 // loop_header_branch
      %27 = sbr.rel (%p25) target = $region8
    $region5: #{fixed_class_deep_biaffine.1} parent=1 // loop_body
      %s29 = ssub.s32 %s24, 1
      %s30 = ssub.s32 %s24, 2
      %s40 = sadd.s32 1, %s33
      %p41 = scmp.ge.s32.totalorder %s40, 4
      %s42 = scalar_select %p41, 0, %s40
      %s43 = sadd.s32 1, %s32
      %s44 = scalar_select %p41, %s43, %s32
      %p45 = scmp.ge.s32.totalorder %s44, 1
      %s46 = scalar_select %p45, 0, %s44
      %s47 = sadd.s32 1, %s31
      %s48 = scalar_select %p45, %s47, %s31
      %p49 = scmp.ge.s32.totalorder %s48, 2
      %s50 = scalar_select %p49, 0, %s48
      %s51 = ssub.s32 %s31, %s50
      %s52 = ssub.s32 %s32, %s46
      %s53 = sor.u32 %s51, %s52
      %p54 = scmp.eq.s32.totalorder %s53, 0
      %s56 = sadd.s32 %s55, 1
      %s57 = scalar_select %p54, %s55, %s56
      %p60 = pneg %p54
      %p61 = scmp.eq.s32.totalorder %s24, 7
      %p62 = por %p60, %p61
      %p63 = scmp.ne.s32.totalorder %s55, %s58
      %p64 = scmp.eq.s32.totalorder %s24, 0
      %p65 = por %p63, %p64
      %p66 = scmp.ne.s32.totalorder %s55, %s58
      %p67 = scmp.eq.s32.totalorder %s29, 7
      %p68 = por %p66, %p67
      %p69 = scmp.ne.s32.totalorder %s58, %s59
      %p70 = scmp.eq.s32.totalorder %s29, 0
      %p71 = por %p69, %p70
      %p72 = scmp.ne.s32.totalorder %s58, %s59
      %p73 = scmp.eq.s32.totalorder %s30, 7
      %p74 = por %p72, %p73
      %p76 = scmp.ne.s32.totalorder %s59, %s75
      %p77 = scmp.eq.s32.totalorder %s30, 0
      %p78 = por %p76, %p77
      %s79 = ssub.s32 %s31, %s50
      %p80 = scmp.eq.s32.totalorder %s79, 0
      %s82 = sadd.s32 %s81, 1
      %s83 = scalar_select %p80, %s81, %s82
      %p86 = pneg %p80
      %p87 = scmp.eq.s32.totalorder %s24, 7
      %p88 = por %p86, %p87
      %p89 = scmp.ne.s32.totalorder %s81, %s84
      %p90 = scmp.eq.s32.totalorder %s24, 0
      %p91 = por %p89, %p90
      %p92 = scmp.ne.s32.totalorder %s81, %s84
      %p93 = scmp.eq.s32.totalorder %s29, 7
      %p94 = por %p92, %p93
      %p95 = scmp.ne.s32.totalorder %s84, %s85
      %p96 = scmp.eq.s32.totalorder %s29, 0
      %p97 = por %p95, %p96
      %p98 = scmp.ne.s32.totalorder %s84, %s85
      %p99 = scmp.eq.s32.totalorder %s30, 7
      %p100 = por %p98, %p99
      %p102 = scmp.ne.s32.totalorder %s85, %s101
      %p103 = scmp.eq.s32.totalorder %s30, 0
      %p104 = por %p102, %p103
      %s106 = sadd.s32 %s105, 1
      %p109 = scmp.eq.s32.totalorder %s24, 7
      %p110 = scmp.ne.s32.totalorder %s105, %s107
      %p111 = scmp.eq.s32.totalorder %s24, 0
      %p112 = por %p110, %p111
      %p113 = scmp.ne.s32.totalorder %s105, %s107
      %p114 = scmp.eq.s32.totalorder %s29, 7
      %p115 = por %p113, %p114
      %p116 = scmp.ne.s32.totalorder %s107, %s108
      %p117 = scmp.eq.s32.totalorder %s29, 0
      %p118 = por %p116, %p117
      %p119 = scmp.ne.s32.totalorder %s107, %s108
      %p120 = scmp.eq.s32.totalorder %s30, 7
      %p121 = por %p119, %p120
      %p123 = scmp.ne.s32.totalorder %s108, %s122
      %p124 = scmp.eq.s32.totalorder %s30, 0
      %p125 = por %p123, %p124
      %s127 = sadd.s32 %s126, 1
      %p130 = scmp.eq.s32.totalorder %s24, 7
      %p131 = scmp.ne.s32.totalorder %s126, %s128
      %p132 = scmp.eq.s32.totalorder %s24, 0
      %p133 = por %p131, %p132
      %p134 = scmp.ne.s32.totalorder %s126, %s128
      %p135 = scmp.eq.s32.totalorder %s29, 7
      %p136 = por %p134, %p135
      %p137 = scmp.ne.s32.totalorder %s128, %s129
      %p138 = scmp.eq.s32.totalorder %s29, 0
      %p139 = por %p137, %p138
      %p140 = scmp.ne.s32.totalorder %s128, %s129
      %p141 = scmp.eq.s32.totalorder %s30, 7
      %p142 = por %p140, %p141
      %p144 = scmp.ne.s32.totalorder %s129, %s143
      %p145 = scmp.eq.s32.totalorder %s30, 0
      %p146 = por %p144, %p145
      %s148 = sadd.s32 %s147, 1
      %p151 = scmp.eq.s32.totalorder %s24, 7
      %p152 = scmp.ne.s32.totalorder %s147, %s149
      %p153 = scmp.eq.s32.totalorder %s24, 0
      %p154 = por %p152, %p153
      %p155 = scmp.ne.s32.totalorder %s147, %s149
      %p156 = scmp.eq.s32.totalorder %s29, 7
      %p157 = por %p155, %p156
      %p158 = scmp.ne.s32.totalorder %s149, %s150
      %p159 = scmp.eq.s32.totalorder %s29, 0
      %p160 = por %p158, %p159
      %p161 = scmp.ne.s32.totalorder %s149, %s150
      %p162 = scmp.eq.s32.totalorder %s30, 7
      %p163 = por %p161, %p162
      %p165 = scmp.ne.s32.totalorder %s150, %s164
      %p166 = scmp.eq.s32.totalorder %s30, 0
      %p167 = por %p165, %p166
      %s169 = sadd.s32 %s168, 1
      %p172 = scmp.eq.s32.totalorder %s24, 7
      %p173 = scmp.ne.s32.totalorder %s168, %s170
      %p174 = scmp.eq.s32.totalorder %s24, 0
      %p175 = por %p173, %p174
      %p176 = scmp.ne.s32.totalorder %s168, %s170
      %p177 = scmp.eq.s32.totalorder %s29, 7
      %p178 = por %p176, %p177
      %p179 = scmp.ne.s32.totalorder %s170, %s171
      %p180 = scmp.eq.s32.totalorder %s29, 0
      %p181 = por %p179, %p180
      %p182 = scmp.ne.s32.totalorder %s170, %s171
      %p183 = scmp.eq.s32.totalorder %s30, 7
      %p184 = por %p182, %p183
      %p186 = scmp.ne.s32.totalorder %s171, %s185
      %p187 = scmp.eq.s32.totalorder %s30, 0
      %p188 = por %p186, %p187
      %s189 = ssub.s32 %s33, %s42
      %p190 = scmp.eq.s32.totalorder %s189, 0
      %s192 = sadd.s32 %s191, 1
      %s193 = scalar_select %p190, %s191, %s192
      %p196 = pneg %p190
      %p197 = scmp.eq.s32.totalorder %s24, 7
      %p198 = por %p196, %p197
      %p199 = scmp.ne.s32.totalorder %s191, %s194
      %p200 = scmp.eq.s32.totalorder %s24, 0
      %p201 = por %p199, %p200
      %p202 = scmp.ne.s32.totalorder %s191, %s194
      %p203 = scmp.eq.s32.totalorder %s29, 7
      %p204 = por %p202, %p203
      %p205 = scmp.ne.s32.totalorder %s194, %s195
      %p206 = scmp.eq.s32.totalorder %s29, 0
      %p207 = por %p205, %p206
      %p208 = scmp.ne.s32.totalorder %s194, %s195
      %p209 = scmp.eq.s32.totalorder %s30, 7
      %p210 = por %p208, %p209
      %p212 = scmp.ne.s32.totalorder %s195, %s211
      %p213 = scmp.eq.s32.totalorder %s30, 0
      %p214 = por %p212, %p213
      %s215 = ssub.s32 %s31, %s50
      %s216 = ssub.s32 %s33, %s42
      %s217 = sor.u32 %s215, %s216
      %s218 = ssub.s32 %s32, %s46
      %s219 = sor.u32 %s217, %s218
      %p220 = scmp.eq.s32.totalorder %s219, 0
      %s222 = sadd.s32 %s221, 1
      %s223 = scalar_select %p220, %s221, %s222
      %p226 = pneg %p220
      %p227 = scmp.eq.s32.totalorder %s24, 7
      %p228 = por %p226, %p227
      %p229 = scmp.ne.s32.totalorder %s221, %s224
      %p230 = scmp.eq.s32.totalorder %s24, 0
      %p231 = por %p229, %p230
      %p232 = scmp.ne.s32.totalorder %s221, %s224
      %p233 = scmp.eq.s32.totalorder %s29, 7
      %p234 = por %p232, %p233
      %p235 = scmp.ne.s32.totalorder %s224, %s225
      %p236 = scmp.eq.s32.totalorder %s29, 0
      %p237 = por %p235, %p236
      %p238 = scmp.ne.s32.totalorder %s224, %s225
      %p239 = scmp.eq.s32.totalorder %s30, 7
      %p240 = por %p238, %p239
      %p242 = scmp.ne.s32.totalorder %s225, %s241
      %p243 = scmp.eq.s32.totalorder %s30, 0
      %p244 = por %p242, %p243
      %p245 = scmp.le.s32.totalorder 1, %s24
      %p246 = scmp.lt.s32.totalorder %s24, 9
      %p247 = pnand %p245, %p246
      %p248 = pneg %p247
      // Predicated region
      $region9: #{fixed_class_deep_biaffine.1} parent=5 // pred_check
        _
      $region10: #{fixed_class_deep_biaffine.1} parent=5 // pred_check_branch
        %250 = sbr.rel (%p247) target = $region12
      $region11: #{fixed_class_deep_biaffine.1} parent=5 // pred_region
        %s251 = ssub.s32 %s24, 1
        // Predicated region
        $region13: #{fixed_class_deep_biaffine.1} parent=11 // pred_check
          %p252 = pneg %p118
        $region14: #{fixed_class_deep_biaffine.1} parent=11 // pred_check_branch
          %254 = sbr.rel (%p252) target = $region16
        $region15: #{fixed_class_deep_biaffine.1} parent=11 // pred_region
          %s256 = ssub.s32 512, 512
          %257 = vsyncadd [#allocation8], %s256
          %s258 = sshll.u32 [#allocation9], 4
          %s259 = int_to_ptr.vmem [resolvable:$true] %s258
          %264 = dma.hbm_to_vmem [thread:$0]  %s2, 512, %s259, [#allocation8], 128, 128, 8
        $region16: #{fixed_class_deep_biaffine.1} parent=11 // pred_fallthru
          _
        // Predicated region
        $region17: #{fixed_class_deep_biaffine.1} parent=11 // pred_check
          %p265 = pneg %p139
        $region18: #{fixed_class_deep_biaffine.1} parent=11 // pred_check_branch
          %267 = sbr.rel (%p265) target = $region20
        $region19: #{fixed_class_deep_biaffine.1} parent=11 // pred_region
          %s269 = ssub.s32 16, 16
          %270 = vsyncadd [#allocation11], %s269
          %s272 = sshll.u32 [#allocation10], 4
          %s273 = int_to_ptr.vmem [resolvable:$true] %s272
          %275 = dma.hbm_to_vmem [thread:$0]  %s3, 16, %s273, [#allocation11]
        $region20: #{fixed_class_deep_biaffine.1} parent=11 // pred_fallthru
          _
        // Predicated region
        $region21: #{fixed_class_deep_biaffine.1} parent=11 // pred_check
          %p276 = pneg %p160
        $region22: #{fixed_class_deep_biaffine.1} parent=11 // pred_check_branch
          %278 = sbr.rel (%p276) target = $region24
        $region23: #{fixed_class_deep_biaffine.1} parent=11 // pred_region
          %s280 = ssub.s32 512, 512
          %281 = vsyncadd [#allocation11], %s280
          %s282 = sshll.u32 [#allocation12], 4
          %s283 = int_to_ptr.vmem [resolvable:$true] %s282
          %288 = dma.hbm_to_vmem [thread:$0]  %s4, 512, %s283, [#allocation11], 128, 128, 8
        $region24: #{fixed_class_deep_biaffine.1} parent=11 // pred_fallthru
          _
        // Predicated region
        $region25: #{fixed_class_deep_biaffine.1} parent=11 // pred_check
          %p289 = pneg %p181
        $region26: #{fixed_class_deep_biaffine.1} parent=11 // pred_check_branch
          %291 = sbr.rel (%p289) target = $region28
        $region27: #{fixed_class_deep_biaffine.1} parent=11 // pred_region
          %s293 = ssub.s32 16, 16
          %294 = vsyncadd [#allocation14], %s293
          %s296 = sshll.u32 [#allocation13], 4
          %s297 = int_to_ptr.vmem [resolvable:$true] %s296
          %299 = dma.hbm_to_vmem [thread:$0]  %s5, 16, %s297, [#allocation14]
        $region28: #{fixed_class_deep_biaffine.1} parent=11 // pred_fallthru
          _
      $region12: #{fixed_class_deep_biaffine.1} parent=5 // pred_fallthru
        _
      %p300 = scmp.lt.s32.totalorder %s24, 8
      // Predicated region
      $region29: #{fixed_class_deep_biaffine.1} parent=5 // pred_check
        %p301 = pneg %p300
      $region30: #{fixed_class_deep_biaffine.1} parent=5 // pred_check_branch
        %303 = sbr.rel (%p301) target = $region32
      $region31: #{fixed_class_deep_biaffine.1} parent=5 // pred_region
        // Predicated region
        $region33: #{fixed_class_deep_biaffine.1} parent=31 // pred_check
          %p304 = pneg %p65
        $region34: #{fixed_class_deep_biaffine.1} parent=31 // pred_check_branch
          %306 = sbr.rel (%p304) target = $region36
        $region35: #{fixed_class_deep_biaffine.1} parent=31 // pred_region
          %s307 = sand.u32 %s24, 1
          %s308 = scalar_lea.sflag [#allocation5], %s307
          %s309 = sand.u32 %s55, 1
          %s310 = smul.addr %s309, 8
          %s311 = scalar_lea.vmem [#allocation4], %s310
          %s313 = ssub.s32 128, 128
          %314 = vsyncadd %s308, %s313
          %s315 = sadd.s32 %s32, %s31
          %s316 = smul.addr %s315, 128
          %s317 = scalar_lea.hbm %s0, %s316
          %s319 = sshll.u32 %s311, 4
          %s320 = int_to_ptr.vmem [resolvable:$true] %s319
          %322 = dma.hbm_to_vmem [thread:$0]  %s317, 128, %s320, %s308
        $region36: #{fixed_class_deep_biaffine.1} parent=31 // pred_fallthru
          _
        // Predicated region
        $region37: #{fixed_class_deep_biaffine.1} parent=31 // pred_check
          %p323 = pneg %p91
        $region38: #{fixed_class_deep_biaffine.1} parent=31 // pred_check_branch
          %325 = sbr.rel (%p323) target = $region40
        $region39: #{fixed_class_deep_biaffine.1} parent=31 // pred_region
          %s326 = sand.u32 %s24, 1
          %s327 = scalar_lea.sflag [#allocation8], %s326
          %s328 = sand.u32 %s81, 1
          %s329 = smul.addr %s328, 8
          %s330 = scalar_lea.vmem [#allocation7], %s329
          %s332 = ssub.s32 128, 128
          %333 = vsyncadd %s327, %s332
          %s334 = smul.addr %s31, 128
          %s335 = scalar_lea.hbm %s1, %s334
          %s337 = sshll.u32 %s330, 4
          %s338 = int_to_ptr.vmem [resolvable:$true] %s337
          %340 = dma.hbm_to_vmem [thread:$0]  %s335, 128, %s338, %s327
        $region40: #{fixed_class_deep_biaffine.1} parent=31 // pred_fallthru
          _
        // Predicated region
        $region41: #{fixed_class_deep_biaffine.1} parent=31 // pred_check
          %p341 = pneg %p201
        $region42: #{fixed_class_deep_biaffine.1} parent=31 // pred_check_branch
          %343 = sbr.rel (%p341) target = $region44
        $region43: #{fixed_class_deep_biaffine.1} parent=31 // pred_region
          %s344 = sand.u32 %s24, 1
          %s345 = scalar_lea.sflag [#allocation5], %s344
          %s346 = sand.u32 %s191, 1
          %s347 = smul.addr %s346, 128
          %s348 = scalar_lea.vmem [#allocation15], %s347
          %s350 = ssub.s32 2048, 2048
          %351 = vsyncadd %s345, %s350
          %s352 = smul.addr %s33, 16
          %s353 = smul.addr %s352, 128
          %s354 = scalar_lea.hbm %s6, %s353
          %s355 = sshll.u32 %s348, 4
          %s356 = int_to_ptr.vmem [resolvable:$true] %s355
          %361 = dma.hbm_to_vmem [thread:$0]  %s354, 2048, %s356, %s345, 128, 128, 8
        $region44: #{fixed_class_deep_biaffine.1} parent=31 // pred_fallthru
          _
      $region32: #{fixed_class_deep_biaffine.1} parent=5 // pred_fallthru
        _
      %p362 = scmp.le.s32.totalorder 1, %s24
      %p363 = scmp.lt.s32.totalorder %s24, 9
      %p364 = pnand %p362, %p363
      %p365 = pneg %p364
      // Predicated region
      $region45: #{fixed_class_deep_biaffine.1} parent=5 // pred_check
        _
      $region46: #{fixed_class_deep_biaffine.1} parent=5 // pred_check_branch
        %367 = sbr.rel (%p364) target = $region48
      $region47: #{fixed_class_deep_biaffine.1} parent=5 // pred_region
        %s368 = ssub.s32 %s24, 1
        %s369 = sand.u32 %s29, 1
        %s370 = scalar_lea.sflag [#allocation5], %s369
        %s371 = sand.u32 %s58, 1
        %s372 = smul.addr %s371, 8
        %s373 = scalar_lea.vmem [#allocation4], %s372
        // Predicated region
        $region49: #{fixed_class_deep_biaffine.1} parent=47 // pred_check
          %p374 = pneg %p71
        $region50: #{fixed_class_deep_biaffine.1} parent=47 // pred_check_branch
          %376 = sbr.rel (%p374) target = $region52
        $region51: #{fixed_class_deep_biaffine.1} parent=47 // pred_region
          %377 = dma.done %s370, 128
        $region52: #{fixed_class_deep_biaffine.1} parent=47 // pred_fallthru
          _
        %s378 = sand.u32 %s29, 1
        %s379 = scalar_lea.sflag [#allocation8], %s378
        %s380 = sand.u32 %s84, 1
        %s381 = smul.addr %s380, 8
        %s382 = scalar_lea.vmem [#allocation7], %s381
        // Predicated region
        $region53: #{fixed_class_deep_biaffine.1} parent=47 // pred_check
          %p383 = pneg %p97
        $region54: #{fixed_class_deep_biaffine.1} parent=47 // pred_check_branch
          %385 = sbr.rel (%p383) target = $region56
        $region55: #{fixed_class_deep_biaffine.1} parent=47 // pred_region
          %386 = dma.done %s379, 128
        $region56: #{fixed_class_deep_biaffine.1} parent=47 // pred_fallthru
          _
        // Predicated region
        $region57: #{fixed_class_deep_biaffine.1} parent=47 // pred_check
          %p387 = pneg %p118
        $region58: #{fixed_class_deep_biaffine.1} parent=47 // pred_check_branch
          %389 = sbr.rel (%p387) target = $region60
        $region59: #{fixed_class_deep_biaffine.1} parent=47 // pred_region
          %390 = dma.done [#allocation8], 512
        $region60: #{fixed_class_deep_biaffine.1} parent=47 // pred_fallthru
          _
        // Predicated region
        $region61: #{fixed_class_deep_biaffine.1} parent=47 // pred_check
          %p391 = pneg %p139
        $region62: #{fixed_class_deep_biaffine.1} parent=47 // pred_check_branch
          %393 = sbr.rel (%p391) target = $region64
        $region63: #{fixed_class_deep_biaffine.1} parent=47 // pred_region
          %394 = dma.done [#allocation11], 16
        $region64: #{fixed_class_deep_biaffine.1} parent=47 // pred_fallthru
          _
        // Predicated region
        $region65: #{fixed_class_deep_biaffine.1} parent=47 // pred_check
          %p395 = pneg %p160
        $region66: #{fixed_class_deep_biaffine.1} parent=47 // pred_check_branch
          %397 = sbr.rel (%p395) target = $region68
        $region67: #{fixed_class_deep_biaffine.1} parent=47 // pred_region
          %398 = dma.done [#allocation11], 512
        $region68: #{fixed_class_deep_biaffine.1} parent=47 // pred_fallthru
          _
        // Predicated region
        $region69: #{fixed_class_deep_biaffine.1} parent=47 // pred_check
          %p399 = pneg %p181
        $region70: #{fixed_class_deep_biaffine.1} parent=47 // pred_check_branch
          %401 = sbr.rel (%p399) target = $region72
        $region71: #{fixed_class_deep_biaffine.1} parent=47 // pred_region
          %402 = dma.done [#allocation14], 16
        $region72: #{fixed_class_deep_biaffine.1} parent=47 // pred_fallthru
          _
        %s403 = sand.u32 %s29, 1
        %s404 = scalar_lea.sflag [#allocation5], %s403
        %s405 = sand.u32 %s194, 1
        %s406 = smul.addr %s405, 128
        %s407 = scalar_lea.vmem [#allocation15], %s406
        // Predicated region
        $region73: #{fixed_class_deep_biaffine.1} parent=47 // pred_check
          %p408 = pneg %p207
        $region74: #{fixed_class_deep_biaffine.1} parent=47 // pred_check_branch
          %410 = sbr.rel (%p408) target = $region76
        $region75: #{fixed_class_deep_biaffine.1} parent=47 // pred_region
          %411 = dma.done %s404, 2048
        $region76: #{fixed_class_deep_biaffine.1} parent=47 // pred_fallthru
          _
        %s412 = sand.u32 %s29, 1
        %s413 = scalar_lea.sflag [#allocation5], %s412
        %s414 = sand.u32 %s58, 1
        %s415 = smul.addr %s414, 8
        %s416 = scalar_lea.vmem [#allocation4], %s415
        %p417 = pneg %p71
        %p418 = pneg %p68
        %s419 = sand.u32 %s29, 1
        %s420 = scalar_lea.sflag [#allocation8], %s419
        %s421 = sand.u32 %s84, 1
        %s422 = smul.addr %s421, 8
        %s423 = scalar_lea.vmem [#allocation7], %s422
        %p424 = pneg %p97
        %p425 = pneg %p94
        %p426 = pneg %p118
        %p427 = pneg %p115
        %p428 = pneg %p139
        %p429 = pneg %p136
        %p430 = pneg %p160
        %p431 = pneg %p157
        %p432 = pneg %p181
        %p433 = pneg %p178
        %s434 = sand.u32 %s29, 1
        %s435 = scalar_lea.sflag [#allocation5], %s434
        %s436 = sand.u32 %s194, 1
        %s437 = smul.addr %s436, 128
        %s438 = scalar_lea.vmem [#allocation15], %s437
        %p439 = pneg %p207
        %p440 = pneg %p204
        %p441 = pneg %p237
        %p442 = pneg %p234
        %s443 = sand.u32 %s224, 1
        %s444 = scalar_lea.sflag [#allocation6], %s443
        %s445 = sand.u32 %s224, 1
        %s446 = smul.addr %s445, 8
        %s447 = scalar_lea.vmem [#allocation16], %s446
        %p448 = scmp.eq.s32.totalorder %s35, 0
        %p449 = scmp.eq.s32.totalorder %s36, 0
        %p450 = pnand %p448, %p449
        %p451 = pneg %p450
        // Predicated region
        $region77: #{fixed_class_deep_biaffine.1} parent=47 // pred_check
          _
        $region78: #{fixed_class_deep_biaffine.1} parent=47 // pred_check_branch
          %453 = sbr.rel (%p450) target = $region80
        $region79: #{fixed_class_deep_biaffine.1} parent=47 // pred_region
          %v454 = vld [vmem:[%s382] sm:$0xff]
          %v455 = vld [vmem:[#allocation12] sm:$0xff]
          %v456 = vld [vmem:[#allocation12 + $0x8] sm:$0xff]
          %v457 = vld [vmem:[#allocation12 + $0x10] sm:$0xff]
          %v458 = vld [vmem:[#allocation12 + $0x18] sm:$0xff]
          %v459 = vld [vmem:[#allocation13] sm:$0x1]
          %v461 = vlaneseq
          %v462 = vshrl.u32 %v461, 7
          %v463 = vsub.s32 0, %v462
          %v464 = vrot.slane %v459, %v463
          %vm466 = vcmask 261120
          %v468 = vsel %vm466, %v454, 0
          %470 = vmatprep.subr.mxu0 0.0
          %471 = vmatpush1.msra.mxu0 %v455
          %472 = vmatprep.subr.mxu0 0.0
          %473 = vmatpush1.msra.mxu0 %v456
          %474 = vmatprep.subr.mxu0 0.0
          %475 = vmatpush1.msra.mxu0 %v457
          %476 = vmatprep.subr.mxu0 0.0
          %477 = vmatpush1.msra.mxu0 %v458
          %478 = vmatprep.subr.mxu0 0.0
          %479 = vmatpush1.msra.mxu0 0.0
          %480 = vmatprep.subr.mxu0 0.0
          %481 = vmatpush1.msra.mxu0 0.0
          %482 = vmatprep.subr.mxu0 0.0
          %483 = vmatpush1.msra.mxu0 0.0
          %484 = vmatprep.subr.mxu0 0.0
          %485 = vmatpush1.msra.mxu0 0.0
          %486 = vmatprep.subr.mxu0 0.0
          %487 = vmatpush1.msra.mxu0 0.0
          %488 = vmatprep.subr.mxu0 0.0
          %489 = vmatpush1.msra.mxu0 0.0
          %490 = vmatprep.subr.mxu0 0.0
          %491 = vmatpush1.msra.mxu0 0.0
          %492 = vmatprep.subr.mxu0 0.0
          %493 = vmatpush1.msra.mxu0 0.0
          %494 = vmatprep.subr.mxu0 0.0
          %495 = vmatpush1.msra.mxu0 0.0
          %496 = vmatprep.subr.mxu0 0.0
          %497 = vmatpush1.msra.mxu0 0.0
          %498 = vmatprep.subr.mxu0 0.0
          %499 = vmatpush1.msra.mxu0 0.0
          %500 = vmatprep.subr.mxu0 0.0
          %501 = vmatpush1.msra.mxu0 0.0
          %502 = vmatprep.subr.mxu0 0.0
          %503 = vmatpush1.msra.mxu0 0.0
          %504 = vmatprep.subr.mxu0 0.0
          %505 = vmatpush1.msra.mxu0 0.0
          %506 = vmatprep.subr.mxu0 0.0
          %507 = vmatpush1.msra.mxu0 0.0
          %508 = vmatprep.subr.mxu0 0.0
          %509 = vmatpush1.msra.mxu0 0.0
          %510 = vmatprep.subr.mxu0 0.0
          %511 = vmatpush1.msra.mxu0 0.0
          %512 = vmatprep.subr.mxu0 0.0
          %513 = vmatpush1.msra.mxu0 0.0
          %514 = vmatprep.subr.mxu0 0.0
          %515 = vmatpush1.msra.mxu0 0.0
          %516 = vmatprep.subr.mxu0 0.0
          %517 = vmatpush1.msra.mxu0 0.0
          %518 = vmatprep.subr.mxu0 0.0
          %519 = vmatpush1.msra.mxu0 0.0
          %520 = vmatprep.subr.mxu0 0.0
          %521 = vmatpush1.msra.mxu0 0.0
          %522 = vmatprep.subr.mxu0 0.0
          %523 = vmatpush1.msra.mxu0 0.0
          %524 = vmatprep.subr.mxu0 0.0
          %525 = vmatpush1.msra.mxu0 0.0
          %526 = vmatprep.subr.mxu0 0.0
          %527 = vmatpush1.msra.mxu0 0.0
          %528 = vmatprep.subr.mxu0 0.0
          %529 = vmatpush1.msra.mxu0 0.0
          %530 = vmatprep.subr.mxu0 0.0
          %531 = vmatpush1.msra.mxu0 0.0
          %532 = vmatprep.subr.mxu0 0.0
          %533 = vmatpush1.msra.mxu0 0.0
          %534 = vmatprep.mubr.f32.mxu0 0.0
          %535 = vmatmul.mubr.f32.gmra.mrb[0].mxu0 %v468
          %v536 = vpop.f32.mrb[0].mxu0
          %v537 = vadd.f32 %v464, %v536
          %v538 = vpop.f32.mrb[0].mxu0
          %539 = vdwg.mxu0
          %v540 = vmax.f32 %v537, 0.0
          %541 = vst [vmem:[#allocation3] sm:$0xff] %v540
        $region80: #{fixed_class_deep_biaffine.1} parent=47 // pred_fallthru
          _
        // Predicated region
        $region81: #{fixed_class_deep_biaffine.1} parent=47 // pred_check
          %p542 = pneg %p449
        $region82: #{fixed_class_deep_biaffine.1} parent=47 // pred_check_branch
          %544 = sbr.rel (%p542) target = $region84
        $region83: #{fixed_class_deep_biaffine.1} parent=47 // pred_region
          %v545 = vld [vmem:[%s373] sm:$0xff]
          %v546 = vld [vmem:[#allocation9] sm:$0xff]
          %v547 = vld [vmem:[#allocation9 + $0x8] sm:$0xff]
          %v548 = vld [vmem:[#allocation9 + $0x10] sm:$0xff]
          %v549 = vld [vmem:[#allocation9 + $0x18] sm:$0xff]
          %v550 = vld [vmem:[#allocation10] sm:$0x1]
          %v552 = vlaneseq
          %v553 = vshrl.u32 %v552, 7
          %v554 = vsub.s32 0, %v553
          %v555 = vrot.slane %v550, %v554
          %vm557 = vcmask 261120
          %v559 = vsel %vm557, %v545, 0
          %561 = vmatprep.subr.mxu0 0.0
          %562 = vmatpush1.msra.mxu0 %v546
          %563 = vmatprep.subr.mxu0 0.0
          %564 = vmatpush1.msra.mxu0 %v547
          %565 = vmatprep.subr.mxu0 0.0
          %566 = vmatpush1.msra.mxu0 %v548
          %567 = vmatprep.subr.mxu0 0.0
          %568 = vmatpush1.msra.mxu0 %v549
          %569 = vmatprep.subr.mxu0 0.0
          %570 = vmatpush1.msra.mxu0 0.0
          %571 = vmatprep.subr.mxu0 0.0
          %572 = vmatpush1.msra.mxu0 0.0
          %573 = vmatprep.subr.mxu0 0.0
          %574 = vmatpush1.msra.mxu0 0.0
          %575 = vmatprep.subr.mxu0 0.0
          %576 = vmatpush1.msra.mxu0 0.0
          %577 = vmatprep.subr.mxu0 0.0
          %578 = vmatpush1.msra.mxu0 0.0
          %579 = vmatprep.subr.mxu0 0.0
          %580 = vmatpush1.msra.mxu0 0.0
          %581 = vmatprep.subr.mxu0 0.0
          %582 = vmatpush1.msra.mxu0 0.0
          %583 = vmatprep.subr.mxu0 0.0
          %584 = vmatpush1.msra.mxu0 0.0
          %585 = vmatprep.subr.mxu0 0.0
          %586 = vmatpush1.msra.mxu0 0.0
          %587 = vmatprep.subr.mxu0 0.0
          %588 = vmatpush1.msra.mxu0 0.0
          %589 = vmatprep.subr.mxu0 0.0
          %590 = vmatpush1.msra.mxu0 0.0
          %591 = vmatprep.subr.mxu0 0.0
          %592 = vmatpush1.msra.mxu0 0.0
          %593 = vmatprep.subr.mxu0 0.0
          %594 = vmatpush1.msra.mxu0 0.0
          %595 = vmatprep.subr.mxu0 0.0
          %596 = vmatpush1.msra.mxu0 0.0
          %597 = vmatprep.subr.mxu0 0.0
          %598 = vmatpush1.msra.mxu0 0.0
          %599 = vmatprep.subr.mxu0 0.0
          %600 = vmatpush1.msra.mxu0 0.0
          %601 = vmatprep.subr.mxu0 0.0
          %602 = vmatpush1.msra.mxu0 0.0
          %603 = vmatprep.subr.mxu0 0.0
          %604 = vmatpush1.msra.mxu0 0.0
          %605 = vmatprep.subr.mxu0 0.0
          %606 = vmatpush1.msra.mxu0 0.0
          %607 = vmatprep.subr.mxu0 0.0
          %608 = vmatpush1.msra.mxu0 0.0
          %609 = vmatprep.subr.mxu0 0.0
          %610 = vmatpush1.msra.mxu0 0.0
          %611 = vmatprep.subr.mxu0 0.0
          %612 = vmatpush1.msra.mxu0 0.0
          %613 = vmatprep.subr.mxu0 0.0
          %614 = vmatpush1.msra.mxu0 0.0
          %615 = vmatprep.subr.mxu0 0.0
          %616 = vmatpush1.msra.mxu0 0.0
          %617 = vmatprep.subr.mxu0 0.0
          %618 = vmatpush1.msra.mxu0 0.0
          %619 = vmatprep.subr.mxu0 0.0
          %620 = vmatpush1.msra.mxu0 0.0
          %621 = vmatprep.subr.mxu0 0.0
          %622 = vmatpush1.msra.mxu0 0.0
          %623 = vmatprep.subr.mxu0 0.0
          %624 = vmatpush1.msra.mxu0 0.0
          %625 = vmatprep.mubr.f32.mxu0 0.0
          %626 = vmatmul.mubr.f32.gmra.mrb[0].mxu0 %v559
          %v627 = vpop.f32.mrb[0].mxu0
          %v628 = vadd.f32 %v555, %v627
          %v629 = vpop.f32.mrb[0].mxu0
          %630 = vdwg.mxu0
          %v631 = vmax.f32 %v628, 0.0
          %632 = vst [vmem:[#allocation2] sm:$0xff] %v631
        $region84: #{fixed_class_deep_biaffine.1} parent=47 // pred_fallthru
          _
        %v633 = vld [vmem:[#allocation2] sm:$0xff]
        %v634 = vld [vmem:[%s407] sm:$0xff]
        %v635 = vld [vmem:[%s407 + $0x8] sm:$0xff]
        %v636 = vld [vmem:[%s407 + $0x10] sm:$0xff]
        %v637 = vld [vmem:[%s407 + $0x18] sm:$0xff]
        %v638 = vld [vmem:[%s407 + $0x20] sm:$0xff]
        %v639 = vld [vmem:[%s407 + $0x28] sm:$0xff]
        %v640 = vld [vmem:[%s407 + $0x30] sm:$0xff]
        %v641 = vld [vmem:[%s407 + $0x38] sm:$0xff]
        %v642 = vld [vmem:[%s407 + $0x40] sm:$0xff]
        %v643 = vld [vmem:[%s407 + $0x48] sm:$0xff]
        %v644 = vld [vmem:[%s407 + $0x50] sm:$0xff]
        %v645 = vld [vmem:[%s407 + $0x58] sm:$0xff]
        %v646 = vld [vmem:[%s407 + $0x60] sm:$0xff]
        %v647 = vld [vmem:[%s407 + $0x68] sm:$0xff]
        %v648 = vld [vmem:[%s407 + $0x70] sm:$0xff]
        %v649 = vld [vmem:[%s407 + $0x78] sm:$0xff]
        %650 = vmatprep.subr.mxu0 0.0
        %651 = vmatpush1.msra.mxu0 %v634
        %652 = vmatprep.subr.mxu0 0.0
        %653 = vmatpush1.msra.mxu0 %v635
        %654 = vmatprep.subr.mxu0 0.0
        %655 = vmatpush1.msra.mxu0 %v636
        %656 = vmatprep.subr.mxu0 0.0
        %657 = vmatpush1.msra.mxu0 %v637
        %658 = vmatprep.subr.mxu0 0.0
        %659 = vmatpush1.msra.mxu0 %v638
        %660 = vmatprep.subr.mxu0 0.0
        %661 = vmatpush1.msra.mxu0 %v639
        %662 = vmatprep.subr.mxu0 0.0
        %663 = vmatpush1.msra.mxu0 %v640
        %664 = vmatprep.subr.mxu0 0.0
        %665 = vmatpush1.msra.mxu0 %v641
        %666 = vmatprep.subr.mxu0 0.0
        %667 = vmatpush1.msra.mxu0 %v642
        %668 = vmatprep.subr.mxu0 0.0
        %669 = vmatpush1.msra.mxu0 %v643
        %670 = vmatprep.subr.mxu0 0.0
        %671 = vmatpush1.msra.mxu0 %v644
        %672 = vmatprep.subr.mxu0 0.0
        %673 = vmatpush1.msra.mxu0 %v645
        %674 = vmatprep.subr.mxu0 0.0
        %675 = vmatpush1.msra.mxu0 %v646
        %676 = vmatprep.subr.mxu0 0.0
        %677 = vmatpush1.msra.mxu0 %v647
        %678 = vmatprep.subr.mxu0 0.0
        %679 = vmatpush1.msra.mxu0 %v648
        %680 = vmatprep.subr.mxu0 0.0
        %681 = vmatpush1.msra.mxu0 %v649
        %682 = vmatprep.subr.mxu0 0.0
        %683 = vmatpush1.msra.mxu0 0.0
        %684 = vmatprep.subr.mxu0 0.0
        %685 = vmatpush1.msra.mxu0 0.0
        %686 = vmatprep.subr.mxu0 0.0
        %687 = vmatpush1.msra.mxu0 0.0
        %688 = vmatprep.subr.mxu0 0.0
        %689 = vmatpush1.msra.mxu0 0.0
        %690 = vmatprep.subr.mxu0 0.0
        %691 = vmatpush1.msra.mxu0 0.0
        %692 = vmatprep.subr.mxu0 0.0
        %693 = vmatpush1.msra.mxu0 0.0
        %694 = vmatprep.subr.mxu0 0.0
        %695 = vmatpush1.msra.mxu0 0.0
        %696 = vmatprep.subr.mxu0 0.0
        %697 = vmatpush1.msra.mxu0 0.0
        %698 = vmatprep.subr.mxu0 0.0
        %699 = vmatpush1.msra.mxu0 0.0
        %700 = vmatprep.subr.mxu0 0.0
        %701 = vmatpush1.msra.mxu0 0.0
        %702 = vmatprep.subr.mxu0 0.0
        %703 = vmatpush1.msra.mxu0 0.0
        %704 = vmatprep.subr.mxu0 0.0
        %705 = vmatpush1.msra.mxu0 0.0
        %706 = vmatprep.subr.mxu0 0.0
        %707 = vmatpush1.msra.mxu0 0.0
        %708 = vmatprep.subr.mxu0 0.0
        %709 = vmatpush1.msra.mxu0 0.0
        %710 = vmatprep.subr.mxu0 0.0
        %711 = vmatpush1.msra.mxu0 0.0
        %712 = vmatprep.subr.mxu0 0.0
        %713 = vmatpush1.msra.mxu0 0.0
        %714 = vmatprep.mubr.f32.mxu0 0.0
        %715 = vmatmul.mubr.f32.gmra.mrb[0].mxu0 %v633
        %v716 = vpop.f32.mrb[0].mxu0
        %v717 = vadd.f32 0.0, %v716
        %v718 = vpop.f32.mrb[0].mxu0
        %719 = vdwg.mxu0
        %v720 = vld [vmem:[#allocation3] sm:$0xff]
        %721 = vmatprep.subr.mxu0 0.0
        %722 = vmatpush1.xpose.msra.mxu0 %v720
        %723 = vmatprep.subr.mxu0 0.0
        %724 = vmatpush1.xpose.msra.mxu0 0.0
        %725 = vmatprep.subr.mxu0 0.0
        %726 = vmatpush1.xpose.msra.mxu0 0.0
        %727 = vmatprep.subr.mxu0 0.0
        %728 = vmatpush1.xpose.msra.mxu0 0.0
        %729 = vmatprep.subr.mxu0 0.0
        %730 = vmatpush1.xpose.msra.mxu0 0.0
        %731 = vmatprep.subr.mxu0 0.0
        %732 = vmatpush1.xpose.msra.mxu0 0.0
        %733 = vmatprep.subr.mxu0 0.0
        %734 = vmatpush1.xpose.msra.mxu0 0.0
        %735 = vmatprep.subr.mxu0 0.0
        %736 = vmatpush1.xpose.msra.mxu0 0.0
        %737 = vmatprep.subr.mxu0 0.0
        %738 = vmatpush1.xpose.msra.mxu0 0.0
        %739 = vmatprep.subr.mxu0 0.0
        %740 = vmatpush1.xpose.msra.mxu0 0.0
        %741 = vmatprep.subr.mxu0 0.0
        %742 = vmatpush1.xpose.msra.mxu0 0.0
        %743 = vmatprep.subr.mxu0 0.0
        %744 = vmatpush1.xpose.msra.mxu0 0.0
        %745 = vmatprep.subr.mxu0 0.0
        %746 = vmatpush1.xpose.msra.mxu0 0.0
        %747 = vmatprep.subr.mxu0 0.0
        %748 = vmatpush1.xpose.msra.mxu0 0.0
        %749 = vmatprep.subr.mxu0 0.0
        %750 = vmatpush1.xpose.msra.mxu0 0.0
        %751 = vmatprep.subr.mxu0 0.0
        %752 = vmatpush1.xpose.msra.mxu0 0.0
        %753 = vmatprep.subr.mxu0 0.0
        %754 = vmatpush1.xpose.msra.mxu0 0.0
        %755 = vmatprep.subr.mxu0 0.0
        %756 = vmatpush1.xpose.msra.mxu0 0.0
        %757 = vmatprep.subr.mxu0 0.0
        %758 = vmatpush1.xpose.msra.mxu0 0.0
        %759 = vmatprep.subr.mxu0 0.0
        %760 = vmatpush1.xpose.msra.mxu0 0.0
        %761 = vmatprep.subr.mxu0 0.0
        %762 = vmatpush1.xpose.msra.mxu0 0.0
        %763 = vmatprep.subr.mxu0 0.0
        %764 = vmatpush1.xpose.msra.mxu0 0.0
        %765 = vmatprep.subr.mxu0 0.0
        %766 = vmatpush1.xpose.msra.mxu0 0.0
        %767 = vmatprep.subr.mxu0 0.0
        %768 = vmatpush1.xpose.msra.mxu0 0.0
        %769 = vmatprep.subr.mxu0 0.0
        %770 = vmatpush1.xpose.msra.mxu0 0.0
        %771 = vmatprep.subr.mxu0 0.0
        %772 = vmatpush1.xpose.msra.mxu0 0.0
        %773 = vmatprep.subr.mxu0 0.0
        %774 = vmatpush1.xpose.msra.mxu0 0.0
        %775 = vmatprep.subr.mxu0 0.0
        %776 = vmatpush1.xpose.msra.mxu0 0.0
        %777 = vmatprep.subr.mxu0 0.0
        %778 = vmatpush1.xpose.msra.mxu0 0.0
        %779 = vmatprep.subr.mxu0 0.0
        %780 = vmatpush1.xpose.msra.mxu0 0.0
        %781 = vmatprep.subr.mxu0 0.0
        %782 = vmatpush1.xpose.msra.mxu0 0.0
        %783 = vmatprep.subr.mxu0 0.0
        %784 = vmatpush1.xpose.msra.mxu0 0.0
        %785 = vmatprep.mubr.f32.mxu0 0.0
        %786 = vmatmul.mubr.f32.gmra.mrb[0].mxu0 %v717
        %v787 = vpop.f32.mrb[0].mxu0
        %v788 = vadd.f32 0.0, %v787
        %v789 = vpop.f32.mrb[0].mxu0
        %790 = vdwg.mxu0
        %vm791 = vcmask 64512
        %792 = vst.msk [vmem:[%s447] sm:$0xff] %vm791, %v788
        %s793 = sand.u32 %s224, 1
        %s794 = scalar_lea.sflag [#allocation6], %s793
        %s795 = sand.u32 %s224, 1
        %s796 = smul.addr %s795, 8
        %s797 = scalar_lea.vmem [#allocation16], %s796
        // Predicated region
        $region85: #{fixed_class_deep_biaffine.1} parent=47 // pred_check
          %p798 = pneg %p234
        $region86: #{fixed_class_deep_biaffine.1} parent=47 // pred_check_branch
          %800 = sbr.rel (%p798) target = $region88
        $region87: #{fixed_class_deep_biaffine.1} parent=47 // pred_region
          %s802 = ssub.s32 128, 128
          %803 = vsyncadd %s794, %s802
          %s804 = sadd.s32 %s35, %s36
          %s805 = smul.addr %s34, 4
          %s806 = sadd.s32 %s804, %s805
          %s807 = smul.addr %s806, 128
          %s808 = scalar_lea.hbm %s7, %s807
          %s810 = sshll.u32 %s797, 4
          %s811 = int_to_ptr.vmem [resolvable:$true] %s810
          %813 = dma.vmem_to_hbm [thread:$0]  %s811, 128, %s808, %s794
        $region88: #{fixed_class_deep_biaffine.1} parent=47 // pred_fallthru
          _
      $region48: #{fixed_class_deep_biaffine.1} parent=5 // pred_fallthru
        _
      %p814 = scmp.le.s32.totalorder 2, %s24
      // Predicated region
      $region89: #{fixed_class_deep_biaffine.1} parent=5 // pred_check
        %p815 = pneg %p814
      $region90: #{fixed_class_deep_biaffine.1} parent=5 // pred_check_branch
        %817 = sbr.rel (%p815) target = $region92
      $region91: #{fixed_class_deep_biaffine.1} parent=5 // pred_region
        %s818 = ssub.s32 %s24, 2
        // Predicated region
        $region93: #{fixed_class_deep_biaffine.1} parent=91 // pred_check
          %p819 = pneg %p240
        $region94: #{fixed_class_deep_biaffine.1} parent=91 // pred_check_branch
          %821 = sbr.rel (%p819) target = $region96
        $region95: #{fixed_class_deep_biaffine.1} parent=91 // pred_region
          %s822 = sand.u32 %s225, 1
          %s823 = scalar_lea.sflag [#allocation6], %s822
          %s824 = sand.u32 %s225, 1
          %s825 = smul.addr %s824, 8
          %s826 = scalar_lea.vmem [#allocation16], %s825
          %827 = dma.done %s823, 128
        $region96: #{fixed_class_deep_biaffine.1} parent=91 // pred_fallthru
          _
      $region92: #{fixed_class_deep_biaffine.1} parent=5 // pred_fallthru
        _
    $region6: #{fixed_class_deep_biaffine.1} parent=1 // loop_footer
      %s28 = sadd.s32 1, %s24
    $region7: #{fixed_class_deep_biaffine.1} parent=1 // loop_footer_branch
      %23 = sbr.rel target = $region3
    $region8: #{fixed_class_deep_biaffine.1} parent=1 // loop_exit
      _
    %828 = vsyncpa [#allocation5], 1
    %s829 = scalar_lea.sflag [#allocation5], 1
    %830 = vsyncpa %s829, 1
    %831 = vsyncpa [#allocation8], 1
    %s832 = scalar_lea.sflag [#allocation8], 1
    %833 = vsyncpa %s832, 1
    %834 = vsyncpa [#allocation11], 1
    %835 = vsyncpa [#allocation14], 1
    %836 = vsyncpa [#allocation6], 1
    %s837 = scalar_lea.sflag [#allocation6], 1
    %838 = vsyncpa %s837, 1

</llo_original>
